<compile_context>
chip_gen: v5e
topology: v5e:2x2
jax: 0.10.0
libtpu: 0.0.40
codegen_flags: <defaults>
</compile_context>

<pallas_src>
import jax
import jax.numpy as jnp
from jax.experimental import pallas as pl
from jax.experimental.pallas import tpu as pltpu

BASE_LATENCY = 10


def inverted_residual_kernel(x_ref, wt_ref, b_ref, out_ref):
    # x_ref:   (1, Cin, T)   -- pixels lane-dense on the last axis
    # wt_ref:  (oup, Cin)    -- combined (conv1*BN1*conv2*BN2) weight, resident
    # b_ref:   (oup, 1)      -- folded bias (f32), broadcast across lanes
    # out_ref: (1, oup, T)
    x = x_ref[0]                                                       # (Cin, T)
    y = jnp.dot(wt_ref[...], x, preferred_element_type=jnp.float32)   # (oup, T), f32 accum
    out_ref[0] = (y + b_ref[...]).astype(out_ref.dtype)


def _pick_tile(hw, cap, lane=128):
    """Largest multiple of `lane` that divides the lane-aligned HW and is <= cap."""
    cap = max(cap, lane)
    hw_pad = pl.cdiv(hw, lane) * lane
    units = hw_pad // lane
    best = 1
    for d in range(1, units + 1):
        if units % d == 0 and d * lane <= cap:
            best = d
    return best * lane, hw_pad


def inverted_residual_base(x_nchw, params, *, tile_hw_cap=16384, io_dtype=None):
    """x_nchw: (N, inp, H, W).  Returns (out_nchw, latency_scalar)."""
    N, Cin, H, W = x_nchw.shape
    hw = H * W
    oup = params["w2"].shape[1]
    stream_dtype = jnp.dtype(io_dtype) if io_dtype is not None else x_nchw.dtype

    # --- fold BN1, conv2, BN2 into a single (Cin, oup) weight + (oup,) bias (exact: block is linear)
    w1f = params["w1"] * params["bn1_scale"][None, :]          # (inp, hidden)
    w2f = params["w2"] * params["bn2_scale"][None, :]          # (hidden, oup)
    w_comb = w1f @ w2f                                         # (inp, oup)
    bias = params["bn1_shift"] @ w2f + params["bn2_shift"]     # (oup,)

    wt = jnp.asarray(w_comb.T, stream_dtype)                   # (oup, Cin), lane-dense matmul form
    bias2d = bias.reshape(oup, 1).astype(jnp.float32)          # keep bias/epilogue in f32

    # --- free contiguous reshape: NCHW -> (N, Cin, H*W); pixels on the lane axis
    x3 = x_nchw.reshape(N, Cin, hw).astype(stream_dtype)

    tile_hw, hw_pad = _pick_tile(hw, tile_hw_cap)
    if hw_pad != hw:
        # only hit when H*W is not a multiple of 128 (not the demo shapes)
        x3 = jnp.pad(x3, ((0, 0), (0, 0), (0, hw_pad - hw)))

    num_tiles = hw_pad // tile_hw
    itemsize = jnp.dtype(stream_dtype).itemsize

    out3 = pl.pallas_call(
        inverted_residual_kernel,
        out_shape=jax.ShapeDtypeStruct((N, oup, hw_pad), stream_dtype),
        grid=(N, num_tiles),
        in_specs=[
            pl.BlockSpec((1, Cin, tile_hw), lambda n, i: (n, 0, i)),   # streamed x tiles
            pl.BlockSpec((oup, Cin), lambda n, i: (0, 0)),             # resident weight
            pl.BlockSpec((oup, 1), lambda n, i: (0, 0)),               # resident bias
        ],
        out_specs=pl.BlockSpec((1, oup, tile_hw), lambda n, i: (n, 0, i)),
        compiler_params=pltpu.CompilerParams(
            dimension_semantics=("parallel", "parallel"),   # both axes shardable across TCs (v7x)
            vmem_limit_bytes=32 * 1024 * 1024,
        ),
        cost_estimate=pl.CostEstimate(
            flops=2 * N * hw_pad * Cin * oup,
            transcendentals=0,
            bytes_accessed=int(N * hw_pad * (Cin + oup) * itemsize + (oup * Cin + oup) * 4),
        ),
    )(x3, wt, bias2d)

    out3 = out3 if hw_pad == hw else out3[:, :, :hw]
    out_nchw = out3.reshape(N, oup, H, W)                      # free contiguous reshape back

    # latency is independent of x -> compute once in plain JAX (not per grid step)
    es = jnp.sum(jax.nn.sigmoid(params["expansion_mask"].astype(jnp.float32)))
    latency = Cin * es * BASE_LATENCY + es * BASE_LATENCY + BASE_LATENCY
    return out_nchw, latency


def make_params(inp, oup, expansion=6, key=jax.random.PRNGKey(0)):
    hidden = expansion * inp
    k1, k2 = jax.random.split(key, 2)
    eps = 1e-5

    # Conv2d(inp, hidden, 1, bias=False): torch weight (hidden, inp, 1, 1) -> matmul form (inp, hidden)
    w1 = jax.random.normal(k1, (inp, hidden), dtype=jnp.float32) * 0.1
    # Conv2d(hidden, oup, 1, bias=False): torch weight (oup, hidden, 1, 1) -> matmul form (hidden, oup)
    w2 = jax.random.normal(k2, (hidden, oup), dtype=jnp.float32) * 0.1

    # BatchNorm2d defaults at __init__: gamma=1, beta=0, running_mean=0, running_var=1
    gamma1 = jnp.ones((hidden,), jnp.float32); beta1 = jnp.zeros((hidden,), jnp.float32)
    mean1 = jnp.zeros((hidden,), jnp.float32); var1 = jnp.ones((hidden,), jnp.float32)
    gamma2 = jnp.ones((oup,), jnp.float32);    beta2 = jnp.zeros((oup,), jnp.float32)
    mean2 = jnp.zeros((oup,), jnp.float32);    var2 = jnp.ones((oup,), jnp.float32)

    bn1_scale = gamma1 / jnp.sqrt(var1 + eps)
    bn1_shift = beta1 - mean1 * bn1_scale
    bn2_scale = gamma2 / jnp.sqrt(var2 + eps)
    bn2_shift = beta2 - mean2 * bn2_scale

    # nn.Parameter(torch.ones(hidden_dim)) — expansion_mask init
    expansion_mask = jnp.ones((hidden,), jnp.float32)

    return {
        "w1": w1, "w2": w2,
        "bn1_scale": bn1_scale, "bn1_shift": bn1_shift,
        "bn2_scale": bn2_scale, "bn2_shift": bn2_shift,
        "expansion_mask": expansion_mask,
    }


if __name__ == "__main__":
    # small shapes: batch=2, inp=4, oup=4, stride=1, expansion=6 -> hidden=24, H=W=16
    N, inp, oup, H, W = 2, 4, 4, 16, 16
    key = jax.random.PRNGKey(0)
    kx, kp = jax.random.split(key)
    x = jax.random.normal(kx, (N, inp, H, W), dtype=jnp.float32)
    params = make_params(inp, oup, expansion=6, key=kp)

    # reference in plain JAX (unfused math, same inference-mode BN semantics)
    x2d = jnp.transpose(x, (0, 2, 3, 1)).reshape(-1, inp)
    ref = (x2d @ params["w1"]) * params["bn1_scale"] + params["bn1_shift"]
    ref = (ref @ params["w2"]) * params["bn2_scale"] + params["bn2_shift"]
    ref = ref.reshape(N, H, W, oup).transpose(0, 3, 1, 2)
    es = jnp.sum(jax.nn.sigmoid(params["expansion_mask"]))
    ref_lat = inp * es * BASE_LATENCY + es * BASE_LATENCY + BASE_LATENCY

    # f32 run (matches module numerics)
    out, latency = inverted_residual_base(x, params)
    jax.block_until_ready(out)
    jax.block_until_ready(latency)
    assert jnp.allclose(out, ref, atol=1e-4, rtol=1e-4)
    assert jnp.allclose(latency, ref_lat, atol=1e-3, rtol=1e-5)

    # bf16-streamed run (halves HBM bytes; f32 accumulation inside the kernel)
    out_bf16, _ = inverted_residual_base(x, params, io_dtype=jnp.bfloat16)
    jax.block_until_ready(out_bf16)
    assert jnp.allclose(out_bf16.astype(jnp.float32), ref, atol=2e-2, rtol=2e-2)

    print("KERNEL_OK")
</pallas_src>

<mosaic_0001>
module attributes {stable_mosaic.version = 11 : i64} {
  func.func @inverted_residual_kernel(%arg0: i32, %arg1: i32, %arg2: memref<1x4x256xf32, #tpu.memory_space<vmem>>, %arg3: memref<4x4xf32, #tpu.memory_space<vmem>>, %arg4: memref<4x1xf32, #tpu.memory_space<vmem>>, %arg5: memref<1x4x256xf32, #tpu.memory_space<vmem>>) attributes {dimension_semantics = [#tpu.dimension_semantics<parallel>, #tpu.dimension_semantics<parallel>], iteration_bounds = array<i64: 2, 1>, scalar_prefetch = 0 : i64, scratch_operands = 0 : i64, tpu.core_type = #tpu.core_type<tc>, window_params = [{transform_indices = @transform_0, window_bounds = array<i64: 1, 4, 256>}, {pipeline_mode = #tpu.pipeline_mode<synchronous>, transform_indices = @transform_1, window_bounds = array<i64: 4, 4>}, {pipeline_mode = #tpu.pipeline_mode<synchronous>, transform_indices = @transform_2, window_bounds = array<i64: 4, 1>}, {transform_indices = @transform_3, window_bounds = array<i64: 1, 4, 256>}]} {
    %c0 = arith.constant 0 : index
    %c0_0 = arith.constant 0 : index
    %c0_1 = arith.constant 0 : index
    %0 = vector.load %arg2[%c0, %c0_0, %c0_1] : memref<1x4x256xf32, #tpu.memory_space<vmem>>, vector<1x4x256xf32>
    %1 = vector.shape_cast %0 : vector<1x4x256xf32> to vector<4x256xf32>
    %c0_2 = arith.constant 0 : index
    %c0_3 = arith.constant 0 : index
    %2 = vector.load %arg3[%c0_2, %c0_3] : memref<4x4xf32, #tpu.memory_space<vmem>>, vector<4x4xf32>
    %cst = arith.constant dense<0.000000e+00> : vector<4x256xf32>
    %3 = tpu.matmul %2, %1, %cst {dimension_numbers = #tpu.dot_dimension_numbers<[1], [0], [0], [1], [0, 0, 1, 1], [], []>} : vector<4x4xf32>, vector<4x256xf32>, vector<4x256xf32> -> vector<4x256xf32>
    %c0_4 = arith.constant 0 : index
    %c0_5 = arith.constant 0 : index
    %4 = vector.load %arg4[%c0_4, %c0_5] : memref<4x1xf32, #tpu.memory_space<vmem>>, vector<4x1xf32>
    %5 = vector.broadcast %4 : vector<4x1xf32> to vector<4x256xf32>
    %6 = arith.addf %3, %5 : vector<4x256xf32>
    %c0_6 = arith.constant 0 : index
    %c0_7 = arith.constant 0 : index
    %c0_8 = arith.constant 0 : index
    %7 = vector.load %arg5[%c0_6, %c0_7, %c0_8] : memref<1x4x256xf32, #tpu.memory_space<vmem>>, vector<1x4x256xf32>
    %8 = vector.shape_cast %7 : vector<1x4x256xf32> to vector<4x256xf32>
    %9 = vector.shape_cast %6 : vector<4x256xf32> to vector<1x4x256xf32>
    tpu.vector_store %arg5[%c0_6, %c0_7, %c0_8], %9 {strides = array<i32>} : memref<1x4x256xf32, #tpu.memory_space<vmem>>, vector<1x4x256xf32>,
    return
  }
  func.func @transform_0(%arg0: i32, %arg1: i32) -> (i32, i32, i32) {
    %c0_i32 = arith.constant 0 : i32
    %c0_i32_0 = arith.constant 0 : i32
    return %arg0, %c0_i32, %arg1 : i32, i32, i32
  }
  func.func @transform_1(%arg0: i32, %arg1: i32) -> (i32, i32) {
    %c0_i32 = arith.constant 0 : i32
    %c0_i32_0 = arith.constant 0 : i32
    %c0_i32_1 = arith.constant 0 : i32
    return %c0_i32, %c0_i32_0 : i32, i32
  }
  func.func @transform_2(%arg0: i32, %arg1: i32) -> (i32, i32) {
    %c0_i32 = arith.constant 0 : i32
    %c0_i32_0 = arith.constant 0 : i32
    %c0_i32_1 = arith.constant 0 : i32
    return %c0_i32, %c0_i32_0 : i32, i32
  }
  func.func @transform_3(%arg0: i32, %arg1: i32) -> (i32, i32, i32) {
    %c0_i32 = arith.constant 0 : i32
    %c0_i32_0 = arith.constant 0 : i32
    return %arg0, %c0_i32, %arg1 : i32, i32, i32
  }
}

</mosaic_0001>

<llo_original>
// kernel: tpu_custom_call.1
$region0: #{tpu_custom_call.1}
  #allocation0 [shape = 'u32[]', space=smem, size = 0x4, offset = 0x4, fixed_abs, tag = 'smem constant byte address 0x4 - core index']
  #allocation1 [shape = 'u32[72,128]{1,0:T(1,128)}', space=vmem, size = 0x9000, scoped, tag = 'internal scratch']
  %s0 = inlined_call_operand.hbm [shape: f32[2,4,256], index: 0, kind: input, shape index: {}]
  %s1 = inlined_call_operand.vmem [shape: f32[4,4], index: 1, kind: input, shape index: {}]
  %s2 = inlined_call_operand.vmem [shape: f32[4,1], index: 2, kind: input, shape index: {}]
  %s3 = inlined_call_operand.hbm [shape: f32[2,4,256], index: 3, kind: output, shape index: {}]
  %s4 = sld [smem:[#allocation0]]
  $region49: #{tpu_custom_call.1} parent=0
    _
  %s6 = ssub.s32 1, %s4
  %s7 = scalar_select 0, %s6, %s4
  $region1: #{tpu_custom_call.1} parent=0
    #allocation2 [shape = 'u8[8192]{0}', space=vmem, size = 0x2000, scoped, tag = 'input window, operand 0']
    #allocation3 [shape = 's32[2]{0}', space=sflag, size = 0x8, scoped, tag = 'scoped memory for tpu_custom_call.1']
    #allocation4 [shape = 's32[2]{0}', space=sflag, size = 0x8, scoped, tag = 'scoped memory for tpu_custom_call.1']
    #allocation5 [shape = 'u8[8192]{0}', space=vmem, size = 0x2000, scoped, tag = 'output window, operand 0']
    %8 = vsyncpa [#allocation3], 0
    %s9 = scalar_lea.sflag [#allocation3], 1
    %10 = vsyncpa %s9, 0
    %11 = vsyncpa [#allocation4], 0
    %s12 = scalar_lea.sflag [#allocation4], 1
    %13 = vsyncpa %s12, 0
    loop: start=0, step=1, limit=4
    $region2: #{tpu_custom_call.1} parent=1 // loop_pre_header
      _
    $region3: #{tpu_custom_call.1} parent=1 // loop_header
      %s15 = sphi 0, %s19
      %p16 = scmp.ge.s32.totalorder %s15, 4
      %s22 = sphi 0, %s34
      %s23 = sphi 0, %s30
      %s24 = sphi 0, %s22
      %s25 = sphi 0, %s23
      %s26 = sphi 0, %s24
      %s27 = sphi 0, %s25
      %s39 = sphi 0, %s41
      %s42 = sphi 0, %s39
      %s43 = sphi 0, %s42
      %s59 = sphi 0, %s43
      %s63 = sphi 0, %s63
      %s65 = sphi 0, %s63
      %s66 = sphi 0, %s65
      %s80 = sphi 0, %s66
      %s84 = sphi 0, %s84
      %s86 = sphi 0, %s84
      %s87 = sphi 0, %s86
      %s101 = sphi 0, %s87
      %s109 = sphi 0, %s111
      %s112 = sphi 0, %s109
      %s113 = sphi 0, %s112
      %s129 = sphi 0, %s113
    $region4: #{tpu_custom_call.1} parent=1 // loop_header_branch
      %18 = sbr.rel (%p16) target = $region8
    $region5: #{tpu_custom_call.1} parent=1 // loop_body
      %s20 = ssub.s32 %s15, 1
      %s21 = ssub.s32 %s15, 2
      %s28 = sadd.s32 1, %s23
      %p29 = scmp.ge.s32.totalorder %s28, 1
      %s30 = scalar_select %p29, 0, %s28
      %s31 = sadd.s32 1, %s22
      %s32 = scalar_select %p29, %s31, %s22
      %p33 = scmp.ge.s32.totalorder %s32, 2
      %s34 = scalar_select %p33, 0, %s32
      %s35 = ssub.s32 %s22, %s34
      %s36 = ssub.s32 %s23, %s30
      %s37 = sor.u32 %s35, %s36
      %p38 = scmp.eq.s32.totalorder %s37, 0
      %s40 = sadd.s32 %s39, 1
      %s41 = scalar_select %p38, %s39, %s40
      %p44 = pneg %p38
      %p45 = scmp.eq.s32.totalorder %s15, 1
      %p46 = por %p44, %p45
      %p47 = scmp.ne.s32.totalorder %s39, %s42
      %p48 = scmp.eq.s32.totalorder %s15, 0
      %p49 = por %p47, %p48
      %p50 = scmp.ne.s32.totalorder %s39, %s42
      %p51 = scmp.eq.s32.totalorder %s20, 1
      %p52 = por %p50, %p51
      %p53 = scmp.ne.s32.totalorder %s42, %s43
      %p54 = scmp.eq.s32.totalorder %s20, 0
      %p55 = por %p53, %p54
      %p56 = scmp.ne.s32.totalorder %s42, %s43
      %p57 = scmp.eq.s32.totalorder %s21, 1
      %p58 = por %p56, %p57
      %p60 = scmp.ne.s32.totalorder %s43, %s59
      %p61 = scmp.eq.s32.totalorder %s21, 0
      %p62 = por %p60, %p61
      %s64 = sadd.s32 %s63, 1
      %p67 = scmp.eq.s32.totalorder %s15, 1
      %p68 = scmp.ne.s32.totalorder %s63, %s65
      %p69 = scmp.eq.s32.totalorder %s15, 0
      %p70 = por %p68, %p69
      %p71 = scmp.ne.s32.totalorder %s63, %s65
      %p72 = scmp.eq.s32.totalorder %s20, 1
      %p73 = por %p71, %p72
      %p74 = scmp.ne.s32.totalorder %s65, %s66
      %p75 = scmp.eq.s32.totalorder %s20, 0
      %p76 = por %p74, %p75
      %p77 = scmp.ne.s32.totalorder %s65, %s66
      %p78 = scmp.eq.s32.totalorder %s21, 1
      %p79 = por %p77, %p78
      %p81 = scmp.ne.s32.totalorder %s66, %s80
      %p82 = scmp.eq.s32.totalorder %s21, 0
      %p83 = por %p81, %p82
      %s85 = sadd.s32 %s84, 1
      %p88 = scmp.eq.s32.totalorder %s15, 1
      %p89 = scmp.ne.s32.totalorder %s84, %s86
      %p90 = scmp.eq.s32.totalorder %s15, 0
      %p91 = por %p89, %p90
      %p92 = scmp.ne.s32.totalorder %s84, %s86
      %p93 = scmp.eq.s32.totalorder %s20, 1
      %p94 = por %p92, %p93
      %p95 = scmp.ne.s32.totalorder %s86, %s87
      %p96 = scmp.eq.s32.totalorder %s20, 0
      %p97 = por %p95, %p96
      %p98 = scmp.ne.s32.totalorder %s86, %s87
      %p99 = scmp.eq.s32.totalorder %s21, 1
      %p100 = por %p98, %p99
      %p102 = scmp.ne.s32.totalorder %s87, %s101
      %p103 = scmp.eq.s32.totalorder %s21, 0
      %p104 = por %p102, %p103
      %s105 = ssub.s32 %s22, %s34
      %s106 = ssub.s32 %s23, %s30
      %s107 = sor.u32 %s105, %s106
      %p108 = scmp.eq.s32.totalorder %s107, 0
      %s110 = sadd.s32 %s109, 1
      %s111 = scalar_select %p108, %s109, %s110
      %p114 = pneg %p108
      %p115 = scmp.eq.s32.totalorder %s15, 1
      %p116 = por %p114, %p115
      %p117 = scmp.ne.s32.totalorder %s109, %s112
      %p118 = scmp.eq.s32.totalorder %s15, 0
      %p119 = por %p117, %p118
      %p120 = scmp.ne.s32.totalorder %s109, %s112
      %p121 = scmp.eq.s32.totalorder %s20, 1
      %p122 = por %p120, %p121
      %p123 = scmp.ne.s32.totalorder %s112, %s113
      %p124 = scmp.eq.s32.totalorder %s20, 0
      %p125 = por %p123, %p124
      %p126 = scmp.ne.s32.totalorder %s112, %s113
      %p127 = scmp.eq.s32.totalorder %s21, 1
      %p128 = por %p126, %p127
      %p130 = scmp.ne.s32.totalorder %s113, %s129
      %p131 = scmp.eq.s32.totalorder %s21, 0
      %p132 = por %p130, %p131
      %p133 = scmp.le.s32.totalorder 1, %s15
      %p134 = scmp.lt.s32.totalorder %s15, 3
      %p135 = pnand %p133, %p134
      %p136 = pneg %p135
      // Predicated region
      $region9: #{tpu_custom_call.1} parent=5 // pred_check
        _
      $region10: #{tpu_custom_call.1} parent=5 // pred_check_branch
        %138 = sbr.rel (%p135) target = $region12
      $region11: #{tpu_custom_call.1} parent=5 // pred_region
        %s139 = ssub.s32 %s15, 1
        // Predicated region
        $region13: #{tpu_custom_call.1} parent=11 // pred_check
          %p140 = pneg %p76
        $region14: #{tpu_custom_call.1} parent=11 // pred_check_branch
          %142 = sbr.rel (%p140) target = $region16
        $region15: #{tpu_custom_call.1} parent=11 // pred_region
          _
        $region16: #{tpu_custom_call.1} parent=11 // pred_fallthru
          _
        // Predicated region
        $region17: #{tpu_custom_call.1} parent=11 // pred_check
          %p143 = pneg %p97
        $region18: #{tpu_custom_call.1} parent=11 // pred_check_branch
          %145 = sbr.rel (%p143) target = $region20
        $region19: #{tpu_custom_call.1} parent=11 // pred_region
          _
        $region20: #{tpu_custom_call.1} parent=11 // pred_fallthru
          _
      $region12: #{tpu_custom_call.1} parent=5 // pred_fallthru
        _
      %p146 = scmp.lt.s32.totalorder %s15, 2
      // Predicated region
      $region21: #{tpu_custom_call.1} parent=5 // pred_check
        %p147 = pneg %p146
      $region22: #{tpu_custom_call.1} parent=5 // pred_check_branch
        %149 = sbr.rel (%p147) target = $region24
      $region23: #{tpu_custom_call.1} parent=5 // pred_region
        // Predicated region
        $region25: #{tpu_custom_call.1} parent=23 // pred_check
          %p150 = pneg %p49
        $region26: #{tpu_custom_call.1} parent=23 // pred_check_branch
          %152 = sbr.rel (%p150) target = $region28
        $region27: #{tpu_custom_call.1} parent=23 // pred_region
          %s153 = sand.u32 %s39, 1
          %s154 = scalar_lea.sflag [#allocation3], %s153
          %s155 = sand.u32 %s39, 1
          %s156 = smul.addr %s155, 8
          %s157 = scalar_lea.vmem [#allocation2], %s156
          %s158 = smul.u32 2, %s23
          %160 = vsyncadd %s154, 0
          %s161 = smul.addr %s22, 2
          %s162 = sadd.s32 %s158, %s161
          %s163 = smul.addr %s162, 4
          %s164 = scalar_lea.hbm %s0, %s163
          %s166 = sshll.u32 %s164, 4
          %s167 = int_to_ptr.hbm [resolvable:$true] %s166
          %s168 = sshll.u32 %s157, 4
          %s169 = int_to_ptr.vmem [resolvable:$true] %s168
          %171 = dma.hbm_to_vmem [thread:$0]  %s167, 128, %s169, %s154
        $region28: #{tpu_custom_call.1} parent=23 // pred_fallthru
          _
      $region24: #{tpu_custom_call.1} parent=5 // pred_fallthru
        _
      %p172 = scmp.le.s32.totalorder 1, %s15
      %p173 = scmp.lt.s32.totalorder %s15, 3
      %p174 = pnand %p172, %p173
      %p175 = pneg %p174
      // Predicated region
      $region29: #{tpu_custom_call.1} parent=5 // pred_check
        _
      $region30: #{tpu_custom_call.1} parent=5 // pred_check_branch
        %177 = sbr.rel (%p174) target = $region32
      $region31: #{tpu_custom_call.1} parent=5 // pred_region
        %s178 = ssub.s32 %s15, 1
        %s179 = sand.u32 %s42, 1
        %s180 = scalar_lea.sflag [#allocation3], %s179
        %s181 = sand.u32 %s42, 1
        %s182 = smul.addr %s181, 8
        %s183 = scalar_lea.vmem [#allocation2], %s182
        // Predicated region
        $region33: #{tpu_custom_call.1} parent=31 // pred_check
          %p184 = pneg %p55
        $region34: #{tpu_custom_call.1} parent=31 // pred_check_branch
          %186 = sbr.rel (%p184) target = $region36
        $region35: #{tpu_custom_call.1} parent=31 // pred_region
          %188 = dma.done %s180, 128
        $region36: #{tpu_custom_call.1} parent=31 // pred_fallthru
          _
        %s189 = sand.u32 %s42, 1
        %s190 = scalar_lea.sflag [#allocation3], %s189
        %s191 = sand.u32 %s42, 1
        %s192 = smul.addr %s191, 8
        %s193 = scalar_lea.vmem [#allocation2], %s192
        %p194 = pneg %p55
        %p195 = pneg %p52
        %p196 = pneg %p76
        %p197 = pneg %p73
        %p198 = pneg %p97
        %p199 = pneg %p94
        %p200 = pneg %p125
        %p201 = pneg %p122
        %s202 = sand.u32 %s112, 1
        %s203 = scalar_lea.sflag [#allocation4], %s202
        %s204 = sand.u32 %s112, 1
        %s205 = smul.addr %s204, 8
        %s206 = scalar_lea.vmem [#allocation5], %s205
        %s207 = smul.u32 2, %s25
        %s208 = smul.u32 2, %s25
        %v209 = vld [vmem:[%s183] sm:$0xff]
        %v210 = vld [vmem:[%s1] sm:$0xf]
        %v211 = vld [vmem:[%s2] sm:$0xf]
        %213 = vset.pattern.permute.xlu0 0
        %214 = vperm.xlu0 %213, %v211
        %v215 = vpop.permute.xlu0 %214
        %218 = vst [vmem:[#allocation1] ss:$2 sm:$0xff] %v209
        %v219 = vld.sshfl [vmem:[#allocation1] sm:$0xff pattern:$0x75316420]
        %v220 = vld.sshfl [vmem:[#allocation1 + $0x8] sm:$0xff pattern:$0x75316420]
        %vm221 = vcmask 31744
        %v223 = vsel %vm221, %v210, 0
        %vm225 = vcmask 1043456
        %v226 = vsel %vm225, %v219, 0
        %v228 = vsel %vm225, %v220, 0
        %230 = vmatpush.msra.mxu0 0.0
        %231 = vmatpush.msra.mxu0 0.0
        %232 = vmatpush.msra.mxu0 0.0
        %233 = vmatpush.msra.mxu0 0.0
        %234 = vmatpush.msra.mxu0 0.0
        %235 = vmatpush.msra.mxu0 0.0
        %236 = vmatpush.msra.mxu0 0.0
        %237 = vmatpush.msra.mxu0 0.0
        %238 = vmatpush.msra.mxu0 0.0
        %239 = vmatpush.msra.mxu0 0.0
        %240 = vmatpush.msra.mxu0 0.0
        %241 = vmatpush.msra.mxu0 0.0
        %242 = vmatpush.msra.mxu0 0.0
        %243 = vmatpush.msra.mxu0 0.0
        %244 = vmatpush.msra.mxu0 0.0
        %245 = vmatpush.msra.mxu0 %v226
        %246 = vmatmul.f32.gmra.mxu0 %v223
        %v247 = vpop.f32.mrf.mxu0
        %v248 = vadd.f32 %v215, %v247
        %249 = vdwg.mxu0
        %250 = vmatpush.msra.mxu0 0.0
        %251 = vmatpush.msra.mxu0 0.0
        %252 = vmatpush.msra.mxu0 0.0
        %253 = vmatpush.msra.mxu0 0.0
        %254 = vmatpush.msra.mxu0 0.0
        %255 = vmatpush.msra.mxu0 0.0
        %256 = vmatpush.msra.mxu0 0.0
        %257 = vmatpush.msra.mxu0 0.0
        %258 = vmatpush.msra.mxu0 0.0
        %259 = vmatpush.msra.mxu0 0.0
        %260 = vmatpush.msra.mxu0 0.0
        %261 = vmatpush.msra.mxu0 0.0
        %262 = vmatpush.msra.mxu0 0.0
        %263 = vmatpush.msra.mxu0 0.0
        %264 = vmatpush.msra.mxu0 0.0
        %265 = vmatpush.msra.mxu0 %v228
        %266 = vmatmul.f32.gmra.mxu0 %v223
        %v267 = vpop.f32.mrf.mxu0
        %v268 = vadd.f32 %v215, %v267
        %269 = vdwg.mxu0
        %v272 = vrot.slane %v268, 4
        %v273 = vsel %vm225, %v248, %v272
        %275 = vst [vmem:[%s206] sm:$0xff] %v273
        %s276 = sand.u32 %s112, 1
        %s277 = scalar_lea.sflag [#allocation4], %s276
        %s278 = sand.u32 %s112, 1
        %s279 = smul.addr %s278, 8
        %s280 = scalar_lea.vmem [#allocation5], %s279
        // Predicated region
        $region37: #{tpu_custom_call.1} parent=31 // pred_check
          %p281 = pneg %p122
        $region38: #{tpu_custom_call.1} parent=31 // pred_check_branch
          %283 = sbr.rel (%p281) target = $region40
        $region39: #{tpu_custom_call.1} parent=31 // pred_region
          %s284 = smul.u32 2, %s25
          %286 = vsyncadd %s277, 0
          %s287 = smul.addr %s24, 2
          %s288 = sadd.s32 %s284, %s287
          %s289 = smul.addr %s288, 4
          %s290 = scalar_lea.hbm %s3, %s289
          %s292 = sshll.u32 %s280, 4
          %s293 = int_to_ptr.vmem [resolvable:$true] %s292
          %s294 = sshll.u32 %s290, 4
          %s295 = int_to_ptr.hbm [resolvable:$true] %s294
          %297 = dma.vmem_to_hbm [thread:$0]  %s293, 128, %s295, %s277
        $region40: #{tpu_custom_call.1} parent=31 // pred_fallthru
          _
      $region32: #{tpu_custom_call.1} parent=5 // pred_fallthru
        _
      %p298 = scmp.le.s32.totalorder 2, %s15
      // Predicated region
      $region41: #{tpu_custom_call.1} parent=5 // pred_check
        %p299 = pneg %p298
      $region42: #{tpu_custom_call.1} parent=5 // pred_check_branch
        %301 = sbr.rel (%p299) target = $region44
      $region43: #{tpu_custom_call.1} parent=5 // pred_region
        %s302 = ssub.s32 %s15, 2
        // Predicated region
        $region45: #{tpu_custom_call.1} parent=43 // pred_check
          %p303 = pneg %p128
        $region46: #{tpu_custom_call.1} parent=43 // pred_check_branch
          %305 = sbr.rel (%p303) target = $region48
        $region47: #{tpu_custom_call.1} parent=43 // pred_region
          %s306 = sand.u32 %s113, 1
          %s307 = scalar_lea.sflag [#allocation4], %s306
          %s308 = sand.u32 %s113, 1
          %s309 = smul.addr %s308, 8
          %s310 = scalar_lea.vmem [#allocation5], %s309
          %312 = dma.done %s307, 128
        $region48: #{tpu_custom_call.1} parent=43 // pred_fallthru
          _
      $region44: #{tpu_custom_call.1} parent=5 // pred_fallthru
        _
    $region6: #{tpu_custom_call.1} parent=1 // loop_footer
      %s19 = sadd.s32 1, %s15
    $region7: #{tpu_custom_call.1} parent=1 // loop_footer_branch
      %14 = sbr.rel target = $region3
    $region8: #{tpu_custom_call.1} parent=1 // loop_exit
      _
    %313 = vsyncpa [#allocation3], 1
    %s314 = scalar_lea.sflag [#allocation3], 1
    %315 = vsyncpa %s314, 1
    %316 = vsyncpa [#allocation4], 1
    %s317 = scalar_lea.sflag [#allocation4], 1
    %318 = vsyncpa %s317, 1

</llo_original>
